<compile_context>
chip_gen: v7x
topology: tpu7x:2x2x1
jax: 0.10.0
libtpu: 0.0.40
codegen_flags: <defaults>
</compile_context>

<pallas_src>
import functools

import jax
import jax.numpy as jnp
from jax.experimental import pallas as pl
from jax.experimental.pallas import tpu as pltpu


def _round_up(x, m):
    return (x + m - 1) // m * m


def _phoneme_embed_kernel(idx_ref, table_ref, out_ref, *, off_rhyme, off_tone):
    """idx_ref:   (TN, 3) int32 raw phoneme indices (onset, rhyme, tone).
    table_ref: (Vp, Dout) block-diagonal fused embedding table.
    out_ref:   (TN, Dout) = concat(onset_emb, rhyme_emb, tone_emb)."""
    tn = idx_ref.shape[0]
    vp = table_ref.shape[0]

    idx = idx_ref[...]                                             # (TN, 3)
    iota = jax.lax.broadcasted_iota(jnp.int32, (tn, vp), 1)        # (TN, Vp)

    # Vocab offsets folded into the compare targets as compile-time constants
    # (free VPU adds; removes a wrapper-side pass over the index array).
    onset = idx[:, 0:1]
    rhyme = idx[:, 1:2] + off_rhyme
    tone = idx[:, 2:3] + off_tone

    # Combined one-hot: each row has exactly three 1s in disjoint offset
    # ranges, so a single matmul yields the concatenated embeddings.
    onehot = ((iota == onset) | (iota == rhyme) | (iota == tone)
              ).astype(table_ref.dtype)                            # (TN, Vp)

    # Single MXU pass.  HIGHEST keeps the f32 table rows bit-exact through the
    # matmul (with a 0/1 LHS the result is a plain copy of the embedding rows);
    # K = Vp = 128 so the extra passes are cheap.
    out_ref[...] = jax.lax.dot_general(
        onehot, table_ref[...],
        dimension_numbers=(((1,), (0,)), ((), ())),
        precision=jax.lax.Precision.HIGHEST,
        preferred_element_type=jnp.float32,
    ).astype(out_ref.dtype)
    # TODO(synk): v7x-specific further win — pass indices as (3, TN) and build
    # the one-hot transposed (Vp, TN) via sublane broadcasts + an
    # lhs-transposed dot_general, once transposed-LHS matmul lowers without a
    # materialized XLU transpose.
    # TODO(synk): dropout_rate > 0 would use pltpu.prng_seed +
    # pltpu.stateful_bernoulli here; dropout_rate == 0 is an identity.


class PhonemeEmbeddingTPU:
    """Pallas TPU equivalent of PhonemeEmbedding.forward.

    The three embedding tables are fused once at construction time into a
    single block-diagonal (Vp, 3*D) table so the whole forward is a single
    one-hot @ table matmul per row tile.
    """

    def __init__(self, onset_table, rhyme_table, tone_table, *,
                 block_rows=2048, out_dtype=jnp.float32):
        d = onset_table.shape[1]
        assert rhyme_table.shape[1] == d and tone_table.shape[1] == d
        self.embedding_dim = d
        self.d_out = 3 * d
        self.v_on = int(onset_table.shape[0])
        self.v_rh = int(rhyme_table.shape[0])
        self.v_to = int(tone_table.shape[0])
        v_total = self.v_on + self.v_rh + self.v_to
        self.vp = _round_up(v_total, 128)       # lane/MXU-aligned contraction dim
        self.block_rows = int(block_rows)
        self.out_dtype = out_dtype

        # bf16 table + output halves the dominant HBM write (opt-in); default
        # stays f32 for exact nn.Embedding parity.
        table_dtype = jnp.bfloat16 if out_dtype == jnp.bfloat16 else jnp.float32

        # Block-diagonal fused table, built ONCE (hoisted out of forward path):
        # rows [0,V_on) x cols [0,D)      = onset
        # rows [V_on,V_on+V_rh) x [D,2D)  = rhyme
        # rows [...,v_total) x [2D,3D)    = tone; zero elsewhere / in padding.
        table = jnp.zeros((self.vp, self.d_out), dtype=table_dtype)
        table = table.at[0:self.v_on, 0:d].set(onset_table.astype(table_dtype))
        table = table.at[self.v_on:self.v_on + self.v_rh, d:2 * d].set(
            rhyme_table.astype(table_dtype))
        table = table.at[self.v_on + self.v_rh:v_total, 2 * d:3 * d].set(
            tone_table.astype(table_dtype))
        self.table = table

        self._kernel = functools.partial(
            _phoneme_embed_kernel,
            off_rhyme=self.v_on,
            off_tone=self.v_on + self.v_rh,
        )

    def __call__(self, phoneme_tensor):
        b, s, three = phoneme_tensor.shape
        assert three == 3
        n = b * s
        d_out = self.d_out
        vp = self.vp

        # Row tile: as large as useful (amortize per-step overhead) but keep
        # >= 2 grid steps whenever N > 8 so ("parallel",) can shard across
        # both v7x TensorCores.  tn is always a multiple of 8 (sublane rule).
        tn = max(8, min(self.block_rows, _round_up(pl.cdiv(n, 2), 8)))
        n_pad = _round_up(n, tn)
        grid = (n_pad // tn,)

        idx = phoneme_tensor.reshape(n, 3).astype(jnp.int32)
        if n_pad != n:
            # Padded rows read row 0 of each sub-table; sliced off below.
            idx = jnp.pad(idx, ((0, n_pad - n), (0, 0)))

        out_bytes = jnp.dtype(self.out_dtype).itemsize
        tab_bytes = jnp.dtype(self.table.dtype).itemsize
        cost = pl.CostEstimate(
            flops=2 * n_pad * vp * d_out,
            transcendentals=0,
            bytes_accessed=(n_pad * 3 * 4
                            + vp * d_out * tab_bytes
                            + n_pad * d_out * out_bytes),
        )

        out = pl.pallas_call(
            self._kernel,
            out_shape=jax.ShapeDtypeStruct((n_pad, d_out), self.out_dtype),
            grid=grid,
            in_specs=[
                pl.BlockSpec((tn, 3), lambda i: (i, 0)),          # per-tile indices
                pl.BlockSpec((vp, d_out), lambda i: (0, 0)),      # resident fused table
            ],
            out_specs=pl.BlockSpec((tn, d_out), lambda i: (i, 0)),
            compiler_params=pltpu.CompilerParams(
                dimension_semantics=("parallel",),
                vmem_limit_bytes=32 * 1024 * 1024,
            ),
            cost_estimate=cost,
        )(idx, self.table)

        if n_pad != n:
            out = out[:n]
        # Lane dim is exactly 3*D -> no lane slice; reshape is metadata-only.
        return out.reshape(b, s, d_out)


def _reference(phoneme_tensor, onset_table, rhyme_table, tone_table):
    onset = onset_table[phoneme_tensor[:, :, 0]]
    rhyme = rhyme_table[phoneme_tensor[:, :, 1]]
    tone = tone_table[phoneme_tensor[:, :, 2]]
    return jnp.concatenate([onset, rhyme, tone], axis=-1)


if __name__ == "__main__":
    # Synthetic "vocab file": deterministic vocab sizes for onset / rhyme / tone.
    V_ONSET, V_RHYME, V_TONE = 24, 40, 6
    EMBED_DIM = 32          # embedding_dim (small for the example)
    B, S = 2, 8             # batch, seq_len

    key = jax.random.PRNGKey(0)
    k_on, k_rh, k_to, k_idx = jax.random.split(key, 4)

    # nn.Embedding default init ~ N(0, 1)
    onset_table = jax.random.normal(k_on, (V_ONSET, EMBED_DIM), dtype=jnp.float32)
    rhyme_table = jax.random.normal(k_rh, (V_RHYME, EMBED_DIM), dtype=jnp.float32)
    tone_table = jax.random.normal(k_to, (V_TONE, EMBED_DIM), dtype=jnp.float32)

    k1, k2, k3 = jax.random.split(k_idx, 3)
    phoneme_tensor = jnp.stack(
        [
            jax.random.randint(k1, (B, S), 0, V_ONSET),
            jax.random.randint(k2, (B, S), 0, V_RHYME),
            jax.random.randint(k3, (B, S), 0, V_TONE),
        ],
        axis=-1,
    ).astype(jnp.int32)  # (B, S, 3)

    embed = PhonemeEmbeddingTPU(onset_table, rhyme_table, tone_table)
    out = jax.block_until_ready(embed(phoneme_tensor))

    ref = _reference(phoneme_tensor, onset_table, rhyme_table, tone_table)
    assert out.shape == (B, S, 3 * EMBED_DIM), out.shape
    assert out.dtype == jnp.float32
    assert jnp.allclose(out, ref, atol=1e-5), float(jnp.max(jnp.abs(out - ref)))

    print("KERNEL_OK")
</pallas_src>

<mosaic_0001>
module attributes {stable_mosaic.version = 11 : i64} {
  func.func @_phoneme_embed_kernel(%arg0: i32, %arg1: memref<8x3xi32, #tpu.memory_space<vmem>>, %arg2: memref<128x96xf32, #tpu.memory_space<vmem>>, %arg3: memref<8x96xf32, #tpu.memory_space<vmem>>) attributes {dimension_semantics = [#tpu.dimension_semantics<parallel>], iteration_bounds = array<i64: 2>, scalar_prefetch = 0 : i64, scratch_operands = 0 : i64, tpu.core_type = #tpu.core_type<tc>, window_params = [{transform_indices = @transform_0, window_bounds = array<i64: 8, 3>}, {pipeline_mode = #tpu.pipeline_mode<synchronous>, transform_indices = @transform_1, window_bounds = array<i64: 128, 96>}, {transform_indices = @transform_2, window_bounds = array<i64: 8, 96>}]} {
    %c0 = arith.constant 0 : index
    %c0_0 = arith.constant 0 : index
    %0 = vector.load %arg1[%c0, %c0_0] : memref<8x3xi32, #tpu.memory_space<vmem>>, vector<8x3xi32>
    %1 = tpu.iota {dimensions = array<i32: 1>} : vector<8x128xi32>
    %2 = vector.extract_strided_slice %0 {offsets = [0, 0], sizes = [8, 1], strides = [1, 1]} : vector<8x3xi32> to vector<8x1xi32>
    %3 = vector.extract_strided_slice %0 {offsets = [0, 1], sizes = [8, 1], strides = [1, 1]} : vector<8x3xi32> to vector<8x1xi32>
    %c24_i32 = arith.constant 24 : i32
    %4 = vector.broadcast %c24_i32 : i32 to vector<8x1xi32>
    %5 = arith.addi %3, %4 : vector<8x1xi32>
    %6 = vector.extract_strided_slice %0 {offsets = [0, 2], sizes = [8, 1], strides = [1, 1]} : vector<8x3xi32> to vector<8x1xi32>
    %c64_i32 = arith.constant 64 : i32
    %7 = vector.broadcast %c64_i32 : i32 to vector<8x1xi32>
    %8 = arith.addi %6, %7 : vector<8x1xi32>
    %9 = vector.broadcast %2 : vector<8x1xi32> to vector<8x128xi32>
    %10 = arith.cmpi eq, %1, %9 : vector<8x128xi32>
    %11 = vector.broadcast %5 : vector<8x1xi32> to vector<8x128xi32>
    %12 = arith.cmpi eq, %1, %11 : vector<8x128xi32>
    %13 = arith.ori %10, %12 : vector<8x128xi1>
    %14 = vector.broadcast %8 : vector<8x1xi32> to vector<8x128xi32>
    %15 = arith.cmpi eq, %1, %14 : vector<8x128xi32>
    %16 = arith.ori %13, %15 : vector<8x128xi1>
    %17 = arith.extui %16 : vector<8x128xi1> to vector<8x128xi32>
    %18 = arith.sitofp %17 : vector<8x128xi32> to vector<8x128xf32>
    %c0_1 = arith.constant 0 : index
    %c0_2 = arith.constant 0 : index
    %19 = vector.load %arg2[%c0_1, %c0_2] : memref<128x96xf32, #tpu.memory_space<vmem>>, vector<128x96xf32>
    %cst = arith.constant dense<0.000000e+00> : vector<8x96xf32>
    %20 = tpu.matmul %18, %19, %cst {dimension_numbers = #tpu.dot_dimension_numbers<[1], [0], [0], [1], [0, 0, 1, 1], [], []>, precision = #tpu.contract_precision<fp32>} : vector<8x128xf32>, vector<128x96xf32>, vector<8x96xf32> -> vector<8x96xf32>
    %c0_3 = arith.constant 0 : index
    %c0_4 = arith.constant 0 : index
    %21 = vector.load %arg3[%c0_3, %c0_4] : memref<8x96xf32, #tpu.memory_space<vmem>>, vector<8x96xf32>
    tpu.vector_store %arg3[%c0_3, %c0_4], %20 {strides = array<i32>} : memref<8x96xf32, #tpu.memory_space<vmem>>, vector<8x96xf32>,
    return
  }
  func.func @transform_0(%arg0: i32) -> (i32, i32) {
    %c0_i32 = arith.constant 0 : i32
    %c0_i32_0 = arith.constant 0 : i32
    return %arg0, %c0_i32 : i32, i32
  }
  func.func @transform_1(%arg0: i32) -> (i32, i32) {
    %c0_i32 = arith.constant 0 : i32
    %c0_i32_0 = arith.constant 0 : i32
    %c0_i32_1 = arith.constant 0 : i32
    return %c0_i32, %c0_i32_0 : i32, i32
  }
  func.func @transform_2(%arg0: i32) -> (i32, i32) {
    %c0_i32 = arith.constant 0 : i32
    %c0_i32_0 = arith.constant 0 : i32
    return %arg0, %c0_i32 : i32, i32
  }
}

</mosaic_0001>

<llo_original>
// kernel: tpu_custom_call.1
$region0: #{tpu_custom_call.1}
  #allocation0 [shape = 'u32[]', space=smem, size = 0x4, offset = 0x4, fixed_abs, tag = 'smem constant byte address 0x4 - core index']
  #allocation1 [shape = 'u32[144,128]{1,0:T(1,128)}', space=vmem, size = 0x12000, scoped, tag = 'internal scratch']
  %s0 = inlined_call_operand.vmem [shape: s32[16,3], index: 0, kind: input, shape index: {}]
  %s1 = inlined_call_operand.vmem [shape: f32[128,96], index: 1, kind: input, shape index: {}]
  %s2 = inlined_call_operand.hbm [shape: f32[16,96], index: 2, kind: output, shape index: {}]
  %s3 = sld [smem:[#allocation0]]
  $region41: #{tpu_custom_call.1} parent=0
    _
  %s5 = ssub.s32 1, %s3
  %s6 = scalar_select 0, %s5, %s3
  $region1: #{tpu_custom_call.1} parent=0
    #allocation2 [shape = 'u8[8192]{0}', space=vmem, size = 0x2000, scoped, tag = 'output window, operand 0']
    #allocation3 [shape = 's32[2]{0}', space=sflag, size = 0x8, scoped, tag = 'scoped memory for tpu_custom_call.1']
    %7 = vsyncpa [#allocation3], 0
    %s8 = scalar_lea.sflag [#allocation3], 1
    %9 = vsyncpa %s8, 0
    loop: start=0, step=1, limit=4
    $region2: #{tpu_custom_call.1} parent=1 // loop_pre_header
      _
    $region3: #{tpu_custom_call.1} parent=1 // loop_header
      %s11 = sphi 0, %s15
      %p12 = scmp.ge.s32.totalorder %s11, 4
      %s21 = sphi 0, %s23
      %s24 = sphi 0, %s21
      %s25 = sphi 0, %s24
      %s41 = sphi 0, %s25
      %s45 = sphi 0, %s45
      %s47 = sphi 0, %s45
      %s48 = sphi 0, %s47
      %s62 = sphi 0, %s48
      %s68 = sphi 0, %s70
      %s71 = sphi 0, %s68
      %s72 = sphi 0, %s71
      %s88 = sphi 0, %s72
    $region4: #{tpu_custom_call.1} parent=1 // loop_header_branch
      %14 = sbr.rel (%p12) target = $region8
    $region5: #{tpu_custom_call.1} parent=1 // loop_body
      %s16 = ssub.s32 %s11, 1
      %s17 = ssub.s32 %s11, 2
      %s18 = sadd.s32 %s11, 1
      %s19 = ssub.s32 %s11, %s18
      %p20 = scmp.eq.s32.totalorder %s19, 0
      %s22 = sadd.s32 %s21, 1
      %s23 = scalar_select %p20, %s21, %s22
      %p26 = pneg %p20
      %p27 = scmp.eq.s32.totalorder %s11, 1
      %p28 = por %p26, %p27
      %p29 = scmp.ne.s32.totalorder %s21, %s24
      %p30 = scmp.eq.s32.totalorder %s11, 0
      %p31 = por %p29, %p30
      %p32 = scmp.ne.s32.totalorder %s21, %s24
      %p33 = scmp.eq.s32.totalorder %s16, 1
      %p34 = por %p32, %p33
      %p35 = scmp.ne.s32.totalorder %s24, %s25
      %p36 = scmp.eq.s32.totalorder %s16, 0
      %p37 = por %p35, %p36
      %p38 = scmp.ne.s32.totalorder %s24, %s25
      %p39 = scmp.eq.s32.totalorder %s17, 1
      %p40 = por %p38, %p39
      %p42 = scmp.ne.s32.totalorder %s25, %s41
      %p43 = scmp.eq.s32.totalorder %s17, 0
      %p44 = por %p42, %p43
      %s46 = sadd.s32 %s45, 1
      %p49 = scmp.eq.s32.totalorder %s11, 1
      %p50 = scmp.ne.s32.totalorder %s45, %s47
      %p51 = scmp.eq.s32.totalorder %s11, 0
      %p52 = por %p50, %p51
      %p53 = scmp.ne.s32.totalorder %s45, %s47
      %p54 = scmp.eq.s32.totalorder %s16, 1
      %p55 = por %p53, %p54
      %p56 = scmp.ne.s32.totalorder %s47, %s48
      %p57 = scmp.eq.s32.totalorder %s16, 0
      %p58 = por %p56, %p57
      %p59 = scmp.ne.s32.totalorder %s47, %s48
      %p60 = scmp.eq.s32.totalorder %s17, 1
      %p61 = por %p59, %p60
      %p63 = scmp.ne.s32.totalorder %s48, %s62
      %p64 = scmp.eq.s32.totalorder %s17, 0
      %p65 = por %p63, %p64
      %s66 = ssub.s32 %s11, %s18
      %p67 = scmp.eq.s32.totalorder %s66, 0
      %s69 = sadd.s32 %s68, 1
      %s70 = scalar_select %p67, %s68, %s69
      %p73 = pneg %p67
      %p74 = scmp.eq.s32.totalorder %s11, 1
      %p75 = por %p73, %p74
      %p76 = scmp.ne.s32.totalorder %s68, %s71
      %p77 = scmp.eq.s32.totalorder %s11, 0
      %p78 = por %p76, %p77
      %p79 = scmp.ne.s32.totalorder %s68, %s71
      %p80 = scmp.eq.s32.totalorder %s16, 1
      %p81 = por %p79, %p80
      %p82 = scmp.ne.s32.totalorder %s71, %s72
      %p83 = scmp.eq.s32.totalorder %s16, 0
      %p84 = por %p82, %p83
      %p85 = scmp.ne.s32.totalorder %s71, %s72
      %p86 = scmp.eq.s32.totalorder %s17, 1
      %p87 = por %p85, %p86
      %p89 = scmp.ne.s32.totalorder %s72, %s88
      %p90 = scmp.eq.s32.totalorder %s17, 0
      %p91 = por %p89, %p90
      %p92 = scmp.le.s32.totalorder 1, %s11
      %p93 = scmp.lt.s32.totalorder %s11, 3
      %p94 = pnand %p92, %p93
      %p95 = pneg %p94
      // Predicated region
      $region9: #{tpu_custom_call.1} parent=5 // pred_check
        _
      $region10: #{tpu_custom_call.1} parent=5 // pred_check_branch
        %97 = sbr.rel (%p94) target = $region12
      $region11: #{tpu_custom_call.1} parent=5 // pred_region
        %s98 = ssub.s32 %s11, 1
        // Predicated region
        $region13: #{tpu_custom_call.1} parent=11 // pred_check
          %p99 = pneg %p58
        $region14: #{tpu_custom_call.1} parent=11 // pred_check_branch
          %101 = sbr.rel (%p99) target = $region16
        $region15: #{tpu_custom_call.1} parent=11 // pred_region
          _
        $region16: #{tpu_custom_call.1} parent=11 // pred_fallthru
          _
      $region12: #{tpu_custom_call.1} parent=5 // pred_fallthru
        _
      %p102 = scmp.lt.s32.totalorder %s11, 2
      // Predicated region
      $region17: #{tpu_custom_call.1} parent=5 // pred_check
        %p103 = pneg %p102
      $region18: #{tpu_custom_call.1} parent=5 // pred_check_branch
        %105 = sbr.rel (%p103) target = $region20
      $region19: #{tpu_custom_call.1} parent=5 // pred_region
        // Predicated region
        $region21: #{tpu_custom_call.1} parent=19 // pred_check
          %p106 = pneg %p31
        $region22: #{tpu_custom_call.1} parent=19 // pred_check_branch
          %108 = sbr.rel (%p106) target = $region24
        $region23: #{tpu_custom_call.1} parent=19 // pred_region
          %p109 = scmp.lt.s32.totalorder %s11, 1
          %s110 = scalar_select %p109, %s11, 1
          %s111 = smul.addr %s110, 8
          %s112 = scalar_lea.vmem %s0, %s111
        $region24: #{tpu_custom_call.1} parent=19 // pred_fallthru
          _
      $region20: #{tpu_custom_call.1} parent=5 // pred_fallthru
        _
      %p113 = scmp.le.s32.totalorder 1, %s11
      %p114 = scmp.lt.s32.totalorder %s11, 3
      %p115 = pnand %p113, %p114
      %p116 = pneg %p115
      // Predicated region
      $region25: #{tpu_custom_call.1} parent=5 // pred_check
        _
      $region26: #{tpu_custom_call.1} parent=5 // pred_check_branch
        %118 = sbr.rel (%p115) target = $region28
      $region27: #{tpu_custom_call.1} parent=5 // pred_region
        %s119 = ssub.s32 %s11, 1
        %p120 = scmp.lt.s32.totalorder %s16, 1
        %s121 = scalar_select %p120, %s16, 1
        %s122 = smul.addr %s121, 8
        %s123 = scalar_lea.vmem %s0, %s122
        %p124 = pneg %p37
        %p125 = pneg %p34
        %p126 = pneg %p58
        %p127 = pneg %p55
        %p128 = pneg %p84
        %p129 = pneg %p81
        %s130 = sand.u32 %s71, 1
        %s131 = scalar_lea.sflag [#allocation3], %s130
        %s132 = sand.u32 %s71, 1
        %s133 = smul.addr %s132, 8
        %s134 = scalar_lea.vmem [#allocation2], %s133
        %p135 = scmp.lt.s32.totalorder %s16, 1
        %s136 = scalar_select %p135, %s16, 1
        %s137 = smul.addr %s136, 8
        %s138 = scalar_lea.vmem %s0, %s137
        %v139 = vld [vmem:[%s138] sm:$0xff]
        %v140 = vlaneseq
        %v141 = vand.u32 %v140, 127
        %v142 = vadd.s32 %v139, 24
        %v143 = vadd.s32 %v139, 64
        %144 = vset.pattern.permute.xlu0 0
        %145 = vperm.xlu0 %144, %v139
        %v146 = vpop.permute.xlu0 %145
        %vm147 = vcmp.eq.s32.totalorder %v141, %v146
        %148 = vset.pattern.permute.xlu0 1
        %149 = vperm.xlu0 %148, %v142
        %v150 = vpop.permute.xlu0 %149
        %vm151 = vcmp.eq.s32.totalorder %v141, %v150
        %vm152 = vmor %vm147, %vm151
        %153 = vset.pattern.permute.xlu0 2
        %154 = vperm.xlu0 %153, %v143
        %v155 = vpop.permute.xlu0 %154
        %vm156 = vcmp.eq.s32.totalorder %v141, %v155
        %vm157 = vmor %vm152, %vm156
        %v158 = vsel %vm157, 1, 0
        %v159 = vcvt.s32.f32 %v158
        %v160 = vld [vmem:[%s1] sm:$0xff]
        %v161 = vld [vmem:[%s1 + $0x8] sm:$0xff]
        %v162 = vld [vmem:[%s1 + $0x10] sm:$0xff]
        %v163 = vld [vmem:[%s1 + $0x18] sm:$0xff]
        %v164 = vld [vmem:[%s1 + $0x20] sm:$0xff]
        %v165 = vld [vmem:[%s1 + $0x28] sm:$0xff]
        %v166 = vld [vmem:[%s1 + $0x30] sm:$0xff]
        %v167 = vld [vmem:[%s1 + $0x38] sm:$0xff]
        %v168 = vld [vmem:[%s1 + $0x40] sm:$0xff]
        %v169 = vld [vmem:[%s1 + $0x48] sm:$0xff]
        %v170 = vld [vmem:[%s1 + $0x50] sm:$0xff]
        %v171 = vld [vmem:[%s1 + $0x58] sm:$0xff]
        %v172 = vld [vmem:[%s1 + $0x60] sm:$0xff]
        %v173 = vld [vmem:[%s1 + $0x68] sm:$0xff]
        %v174 = vld [vmem:[%s1 + $0x70] sm:$0xff]
        %v175 = vld [vmem:[%s1 + $0x78] sm:$0xff]
        %176 = vmatprep.subr.mxu0 0.0
        %v177 = vand.u32 %v160, 4294901760
        %178 = vmatpush1.msra.mxu0 %v177
        %179 = vmatprep.subr.mxu0 0.0
        %v180 = vand.u32 %v161, 4294901760
        %181 = vmatpush1.msra.mxu0 %v180
        %182 = vmatprep.subr.mxu0 0.0
        %v183 = vand.u32 %v162, 4294901760
        %184 = vmatpush1.msra.mxu0 %v183
        %185 = vmatprep.subr.mxu0 0.0
        %v186 = vand.u32 %v163, 4294901760
        %187 = vmatpush1.msra.mxu0 %v186
        %188 = vmatprep.subr.mxu0 0.0
        %v189 = vand.u32 %v164, 4294901760
        %190 = vmatpush1.msra.mxu0 %v189
        %191 = vmatprep.subr.mxu0 0.0
        %v192 = vand.u32 %v165, 4294901760
        %193 = vmatpush1.msra.mxu0 %v192
        %194 = vmatprep.subr.mxu0 0.0
        %v195 = vand.u32 %v166, 4294901760
        %196 = vmatpush1.msra.mxu0 %v195
        %197 = vmatprep.subr.mxu0 0.0
        %v198 = vand.u32 %v167, 4294901760
        %199 = vmatpush1.msra.mxu0 %v198
        %200 = vmatprep.subr.mxu0 0.0
        %v201 = vand.u32 %v168, 4294901760
        %202 = vmatpush1.msra.mxu0 %v201
        %203 = vmatprep.subr.mxu0 0.0
        %v204 = vand.u32 %v169, 4294901760
        %205 = vmatpush1.msra.mxu0 %v204
        %206 = vmatprep.subr.mxu0 0.0
        %v207 = vand.u32 %v170, 4294901760
        %208 = vmatpush1.msra.mxu0 %v207
        %209 = vmatprep.subr.mxu0 0.0
        %v210 = vand.u32 %v171, 4294901760
        %211 = vmatpush1.msra.mxu0 %v210
        %212 = vmatprep.subr.mxu0 0.0
        %v213 = vand.u32 %v172, 4294901760
        %214 = vmatpush1.msra.mxu0 %v213
        %215 = vmatprep.subr.mxu0 0.0
        %v216 = vand.u32 %v173, 4294901760
        %217 = vmatpush1.msra.mxu0 %v216
        %218 = vmatprep.subr.mxu0 0.0
        %v219 = vand.u32 %v174, 4294901760
        %220 = vmatpush1.msra.mxu0 %v219
        %221 = vmatprep.subr.mxu0 0.0
        %v222 = vand.u32 %v175, 4294901760
        %223 = vmatpush1.msra.mxu0 %v222
        %224 = vmatprep.subr.mxu0 0.0
        %225 = vmatpush1.msra.mxu0 0.0
        %226 = vmatprep.subr.mxu0 0.0
        %227 = vmatpush1.msra.mxu0 0.0
        %228 = vmatprep.subr.mxu0 0.0
        %229 = vmatpush1.msra.mxu0 0.0
        %230 = vmatprep.subr.mxu0 0.0
        %231 = vmatpush1.msra.mxu0 0.0
        %232 = vmatprep.subr.mxu0 0.0
        %233 = vmatpush1.msra.mxu0 0.0
        %234 = vmatprep.subr.mxu0 0.0
        %235 = vmatpush1.msra.mxu0 0.0
        %236 = vmatprep.subr.mxu0 0.0
        %237 = vmatpush1.msra.mxu0 0.0
        %238 = vmatprep.subr.mxu0 0.0
        %239 = vmatpush1.msra.mxu0 0.0
        %240 = vmatprep.subr.mxu0 0.0
        %241 = vmatpush1.msra.mxu0 0.0
        %242 = vmatprep.subr.mxu0 0.0
        %243 = vmatpush1.msra.mxu0 0.0
        %244 = vmatprep.subr.mxu0 0.0
        %245 = vmatpush1.msra.mxu0 0.0
        %246 = vmatprep.subr.mxu0 0.0
        %247 = vmatpush1.msra.mxu0 0.0
        %248 = vmatprep.subr.mxu0 0.0
        %249 = vmatpush1.msra.mxu0 0.0
        %250 = vmatprep.subr.mxu0 0.0
        %251 = vmatpush1.msra.mxu0 0.0
        %252 = vmatprep.subr.mxu0 0.0
        %253 = vmatpush1.msra.mxu0 0.0
        %254 = vmatprep.subr.mxu0 0.0
        %255 = vmatpush1.msra.mxu0 0.0
        %256 = vmatprep.mubr.f32.mxu0 0.0
        %v257 = vand.u32 %v159, 4294901760
        %v258 = vsub.f32 %v159, %v257
        %v259 = vand.u32 %v258, 4294901760
        %v260 = vsub.f32 %v258, %v259
        %v261 = vand.u32 %v260, 4294901760
        %262 = vmatmul.mubr.f32.gmra.mrb[0].mxu0 %v261
        %v263 = vpop.f32.mrb[0].mxu0
        %v264 = vadd.f32 0.0, %v263
        %v265 = vpop.f32.mrb[0].mxu0
        %266 = vdwg.mxu0
        %267 = vmatprep.subr.mxu0 0.0
        %v268 = vand.u32 %v160, 4294901760
        %v269 = vsub.f32 %v160, %v268
        %v270 = vand.u32 %v269, 4294901760
        %v271 = vsub.f32 %v269, %v270
        %v272 = vand.u32 %v271, 4294901760
        %273 = vmatpush1.msra.mxu0 %v272
        %274 = vmatprep.subr.mxu0 0.0
        %v275 = vand.u32 %v161, 4294901760
        %v276 = vsub.f32 %v161, %v275
        %v277 = vand.u32 %v276, 4294901760
        %v278 = vsub.f32 %v276, %v277
        %v279 = vand.u32 %v278, 4294901760
        %280 = vmatpush1.msra.mxu0 %v279
        %281 = vmatprep.subr.mxu0 0.0
        %v282 = vand.u32 %v162, 4294901760
        %v283 = vsub.f32 %v162, %v282
        %v284 = vand.u32 %v283, 4294901760
        %v285 = vsub.f32 %v283, %v284
        %v286 = vand.u32 %v285, 4294901760
        %287 = vmatpush1.msra.mxu0 %v286
        %288 = vmatprep.subr.mxu0 0.0
        %v289 = vand.u32 %v163, 4294901760
        %v290 = vsub.f32 %v163, %v289
        %v291 = vand.u32 %v290, 4294901760
        %v292 = vsub.f32 %v290, %v291
        %v293 = vand.u32 %v292, 4294901760
        %294 = vmatpush1.msra.mxu0 %v293
        %295 = vmatprep.subr.mxu0 0.0
        %v296 = vand.u32 %v164, 4294901760
        %v297 = vsub.f32 %v164, %v296
        %v298 = vand.u32 %v297, 4294901760
        %v299 = vsub.f32 %v297, %v298
        %v300 = vand.u32 %v299, 4294901760
        %301 = vmatpush1.msra.mxu0 %v300
        %302 = vmatprep.subr.mxu0 0.0
        %v303 = vand.u32 %v165, 4294901760
        %v304 = vsub.f32 %v165, %v303
        %v305 = vand.u32 %v304, 4294901760
        %v306 = vsub.f32 %v304, %v305
        %v307 = vand.u32 %v306, 4294901760
        %308 = vmatpush1.msra.mxu0 %v307
        %309 = vmatprep.subr.mxu0 0.0
        %v310 = vand.u32 %v166, 4294901760
        %v311 = vsub.f32 %v166, %v310
        %v312 = vand.u32 %v311, 4294901760
        %v313 = vsub.f32 %v311, %v312
        %v314 = vand.u32 %v313, 4294901760
        %315 = vmatpush1.msra.mxu0 %v314
        %316 = vmatprep.subr.mxu0 0.0
        %v317 = vand.u32 %v167, 4294901760
        %v318 = vsub.f32 %v167, %v317
        %v319 = vand.u32 %v318, 4294901760
        %v320 = vsub.f32 %v318, %v319
        %v321 = vand.u32 %v320, 4294901760
        %322 = vmatpush1.msra.mxu0 %v321
        %323 = vmatprep.subr.mxu0 0.0
        %v324 = vand.u32 %v168, 4294901760
        %v325 = vsub.f32 %v168, %v324
        %v326 = vand.u32 %v325, 4294901760
        %v327 = vsub.f32 %v325, %v326
        %v328 = vand.u32 %v327, 4294901760
        %329 = vmatpush1.msra.mxu0 %v328
        %330 = vmatprep.subr.mxu0 0.0
        %v331 = vand.u32 %v169, 4294901760
        %v332 = vsub.f32 %v169, %v331
        %v333 = vand.u32 %v332, 4294901760
        %v334 = vsub.f32 %v332, %v333
        %v335 = vand.u32 %v334, 4294901760
        %336 = vmatpush1.msra.mxu0 %v335
        %337 = vmatprep.subr.mxu0 0.0
        %v338 = vand.u32 %v170, 4294901760
        %v339 = vsub.f32 %v170, %v338
        %v340 = vand.u32 %v339, 4294901760
        %v341 = vsub.f32 %v339, %v340
        %v342 = vand.u32 %v341, 4294901760
        %343 = vmatpush1.msra.mxu0 %v342
        %344 = vmatprep.subr.mxu0 0.0
        %v345 = vand.u32 %v171, 4294901760
        %v346 = vsub.f32 %v171, %v345
        %v347 = vand.u32 %v346, 4294901760
        %v348 = vsub.f32 %v346, %v347
        %v349 = vand.u32 %v348, 4294901760
        %350 = vmatpush1.msra.mxu0 %v349
        %351 = vmatprep.subr.mxu0 0.0
        %v352 = vand.u32 %v172, 4294901760
        %v353 = vsub.f32 %v172, %v352
        %v354 = vand.u32 %v353, 4294901760
        %v355 = vsub.f32 %v353, %v354
        %v356 = vand.u32 %v355, 4294901760
        %357 = vmatpush1.msra.mxu0 %v356
        %358 = vmatprep.subr.mxu0 0.0
        %v359 = vand.u32 %v173, 4294901760
        %v360 = vsub.f32 %v173, %v359
        %v361 = vand.u32 %v360, 4294901760
        %v362 = vsub.f32 %v360, %v361
        %v363 = vand.u32 %v362, 4294901760
        %364 = vmatpush1.msra.mxu0 %v363
        %365 = vmatprep.subr.mxu0 0.0
        %v366 = vand.u32 %v174, 4294901760
        %v367 = vsub.f32 %v174, %v366
        %v368 = vand.u32 %v367, 4294901760
        %v369 = vsub.f32 %v367, %v368
        %v370 = vand.u32 %v369, 4294901760
        %371 = vmatpush1.msra.mxu0 %v370
        %372 = vmatprep.subr.mxu0 0.0
        %v373 = vand.u32 %v175, 4294901760
        %v374 = vsub.f32 %v175, %v373
        %v375 = vand.u32 %v374, 4294901760
        %v376 = vsub.f32 %v374, %v375
        %v377 = vand.u32 %v376, 4294901760
        %378 = vmatpush1.msra.mxu0 %v377
        %379 = vmatprep.subr.mxu0 0.0
        %380 = vmatpush1.msra.mxu0 0.0
        %381 = vmatprep.subr.mxu0 0.0
        %382 = vmatpush1.msra.mxu0 0.0
        %383 = vmatprep.subr.mxu0 0.0
        %384 = vmatpush1.msra.mxu0 0.0
        %385 = vmatprep.subr.mxu0 0.0
        %386 = vmatpush1.msra.mxu0 0.0
        %387 = vmatprep.subr.mxu0 0.0
        %388 = vmatpush1.msra.mxu0 0.0
        %389 = vmatprep.subr.mxu0 0.0
        %390 = vmatpush1.msra.mxu0 0.0
        %391 = vmatprep.subr.mxu0 0.0
        %392 = vmatpush1.msra.mxu0 0.0
        %393 = vmatprep.subr.mxu0 0.0
        %394 = vmatpush1.msra.mxu0 0.0
        %395 = vmatprep.subr.mxu0 0.0
        %396 = vmatpush1.msra.mxu0 0.0
        %397 = vmatprep.subr.mxu0 0.0
        %398 = vmatpush1.msra.mxu0 0.0
        %399 = vmatprep.subr.mxu0 0.0
        %400 = vmatpush1.msra.mxu0 0.0
        %401 = vmatprep.subr.mxu0 0.0
        %402 = vmatpush1.msra.mxu0 0.0
        %403 = vmatprep.subr.mxu0 0.0
        %404 = vmatpush1.msra.mxu0 0.0
        %405 = vmatprep.subr.mxu0 0.0
        %406 = vmatpush1.msra.mxu0 0.0
        %407 = vmatprep.subr.mxu0 0.0
        %408 = vmatpush1.msra.mxu0 0.0
        %409 = vmatprep.subr.mxu0 0.0
        %410 = vmatpush1.msra.mxu0 0.0
        %411 = vmatprep.mubr.f32.mxu0 0.0
        %v412 = vand.u32 %v159, 4294901760
        %413 = vmatmul.mubr.f32.gmra.mrb[0].mxu0 %v412
        %v414 = vpop.f32.mrb[0].mxu0
        %v415 = vadd.f32 %v264, %v414
        %v416 = vpop.f32.mrb[0].mxu0
        %417 = vdwg.mxu0
        %418 = vmatprep.subr.mxu0 0.0
        %v419 = vand.u32 %v160, 4294901760
        %v420 = vsub.f32 %v160, %v419
        %421 = vmatpush1.msra.mxu0 %v420
        %422 = vmatprep.subr.mxu0 0.0
        %v423 = vand.u32 %v161, 4294901760
        %v424 = vsub.f32 %v161, %v423
        %425 = vmatpush1.msra.mxu0 %v424
        %426 = vmatprep.subr.mxu0 0.0
        %v427 = vand.u32 %v162, 4294901760
        %v428 = vsub.f32 %v162, %v427
        %429 = vmatpush1.msra.mxu0 %v428
        %430 = vmatprep.subr.mxu0 0.0
        %v431 = vand.u32 %v163, 4294901760
        %v432 = vsub.f32 %v163, %v431
        %433 = vmatpush1.msra.mxu0 %v432
        %434 = vmatprep.subr.mxu0 0.0
        %v435 = vand.u32 %v164, 4294901760
        %v436 = vsub.f32 %v164, %v435
        %437 = vmatpush1.msra.mxu0 %v436
        %438 = vmatprep.subr.mxu0 0.0
        %v439 = vand.u32 %v165, 4294901760
        %v440 = vsub.f32 %v165, %v439
        %441 = vmatpush1.msra.mxu0 %v440
        %442 = vmatprep.subr.mxu0 0.0
        %v443 = vand.u32 %v166, 4294901760
        %v444 = vsub.f32 %v166, %v443
        %445 = vmatpush1.msra.mxu0 %v444
        %446 = vmatprep.subr.mxu0 0.0
        %v447 = vand.u32 %v167, 4294901760
        %v448 = vsub.f32 %v167, %v447
        %449 = vmatpush1.msra.mxu0 %v448
        %450 = vmatprep.subr.mxu0 0.0
        %v451 = vand.u32 %v168, 4294901760
        %v452 = vsub.f32 %v168, %v451
        %453 = vmatpush1.msra.mxu0 %v452
        %454 = vmatprep.subr.mxu0 0.0
        %v455 = vand.u32 %v169, 4294901760
        %v456 = vsub.f32 %v169, %v455
        %457 = vmatpush1.msra.mxu0 %v456
        %458 = vmatprep.subr.mxu0 0.0
        %v459 = vand.u32 %v170, 4294901760
        %v460 = vsub.f32 %v170, %v459
        %461 = vmatpush1.msra.mxu0 %v460
        %462 = vmatprep.subr.mxu0 0.0
        %v463 = vand.u32 %v171, 4294901760
        %v464 = vsub.f32 %v171, %v463
        %465 = vmatpush1.msra.mxu0 %v464
        %466 = vmatprep.subr.mxu0 0.0
        %v467 = vand.u32 %v172, 4294901760
        %v468 = vsub.f32 %v172, %v467
        %469 = vmatpush1.msra.mxu0 %v468
        %470 = vmatprep.subr.mxu0 0.0
        %v471 = vand.u32 %v173, 4294901760
        %v472 = vsub.f32 %v173, %v471
        %473 = vmatpush1.msra.mxu0 %v472
        %474 = vmatprep.subr.mxu0 0.0
        %v475 = vand.u32 %v174, 4294901760
        %v476 = vsub.f32 %v174, %v475
        %477 = vmatpush1.msra.mxu0 %v476
        %478 = vmatprep.subr.mxu0 0.0
        %v479 = vand.u32 %v175, 4294901760
        %v480 = vsub.f32 %v175, %v479
        %481 = vmatpush1.msra.mxu0 %v480
        %482 = vmatprep.subr.mxu0 0.0
        %483 = vmatpush1.msra.mxu0 0.0
        %484 = vmatprep.subr.mxu0 0.0
        %485 = vmatpush1.msra.mxu0 0.0
        %486 = vmatprep.subr.mxu0 0.0
        %487 = vmatpush1.msra.mxu0 0.0
        %488 = vmatprep.subr.mxu0 0.0
        %489 = vmatpush1.msra.mxu0 0.0
        %490 = vmatprep.subr.mxu0 0.0
        %491 = vmatpush1.msra.mxu0 0.0
        %492 = vmatprep.subr.mxu0 0.0
        %493 = vmatpush1.msra.mxu0 0.0
        %494 = vmatprep.subr.mxu0 0.0
        %495 = vmatpush1.msra.mxu0 0.0
        %496 = vmatprep.subr.mxu0 0.0
        %497 = vmatpush1.msra.mxu0 0.0
        %498 = vmatprep.subr.mxu0 0.0
        %499 = vmatpush1.msra.mxu0 0.0
        %500 = vmatprep.subr.mxu0 0.0
        %501 = vmatpush1.msra.mxu0 0.0
        %502 = vmatprep.subr.mxu0 0.0
        %503 = vmatpush1.msra.mxu0 0.0
        %504 = vmatprep.subr.mxu0 0.0
        %505 = vmatpush1.msra.mxu0 0.0
        %506 = vmatprep.subr.mxu0 0.0
        %507 = vmatpush1.msra.mxu0 0.0
        %508 = vmatprep.subr.mxu0 0.0
        %509 = vmatpush1.msra.mxu0 0.0
        %510 = vmatprep.subr.mxu0 0.0
        %511 = vmatpush1.msra.mxu0 0.0
        %512 = vmatprep.subr.mxu0 0.0
        %513 = vmatpush1.msra.mxu0 0.0
        %514 = vmatprep.mubr.f32.mxu0 0.0
        %v515 = vand.u32 %v159, 4294901760
        %v516 = vsub.f32 %v159, %v515
        %517 = vmatmul.mubr.f32.gmra.mrb[0].mxu0 %v516
        %v518 = vpop.f32.mrb[0].mxu0
        %v519 = vadd.f32 %v415, %v518
        %v520 = vpop.f32.mrb[0].mxu0
        %521 = vdwg.mxu0
        %522 = vmatprep.subr.mxu0 0.0
        %v523 = vand.u32 %v160, 4294901760
        %524 = vmatpush1.msra.mxu0 %v523
        %525 = vmatprep.subr.mxu0 0.0
        %v526 = vand.u32 %v161, 4294901760
        %527 = vmatpush1.msra.mxu0 %v526
        %528 = vmatprep.subr.mxu0 0.0
        %v529 = vand.u32 %v162, 4294901760
        %530 = vmatpush1.msra.mxu0 %v529
        %531 = vmatprep.subr.mxu0 0.0
        %v532 = vand.u32 %v163, 4294901760
        %533 = vmatpush1.msra.mxu0 %v532
        %534 = vmatprep.subr.mxu0 0.0
        %v535 = vand.u32 %v164, 4294901760
        %536 = vmatpush1.msra.mxu0 %v535
        %537 = vmatprep.subr.mxu0 0.0
        %v538 = vand.u32 %v165, 4294901760
        %539 = vmatpush1.msra.mxu0 %v538
        %540 = vmatprep.subr.mxu0 0.0
        %v541 = vand.u32 %v166, 4294901760
        %542 = vmatpush1.msra.mxu0 %v541
        %543 = vmatprep.subr.mxu0 0.0
        %v544 = vand.u32 %v167, 4294901760
        %545 = vmatpush1.msra.mxu0 %v544
        %546 = vmatprep.subr.mxu0 0.0
        %v547 = vand.u32 %v168, 4294901760
        %548 = vmatpush1.msra.mxu0 %v547
        %549 = vmatprep.subr.mxu0 0.0
        %v550 = vand.u32 %v169, 4294901760
        %551 = vmatpush1.msra.mxu0 %v550
        %552 = vmatprep.subr.mxu0 0.0
        %v553 = vand.u32 %v170, 4294901760
        %554 = vmatpush1.msra.mxu0 %v553
        %555 = vmatprep.subr.mxu0 0.0
        %v556 = vand.u32 %v171, 4294901760
        %557 = vmatpush1.msra.mxu0 %v556
        %558 = vmatprep.subr.mxu0 0.0
        %v559 = vand.u32 %v172, 4294901760
        %560 = vmatpush1.msra.mxu0 %v559
        %561 = vmatprep.subr.mxu0 0.0
        %v562 = vand.u32 %v173, 4294901760
        %563 = vmatpush1.msra.mxu0 %v562
        %564 = vmatprep.subr.mxu0 0.0
        %v565 = vand.u32 %v174, 4294901760
        %566 = vmatpush1.msra.mxu0 %v565
        %567 = vmatprep.subr.mxu0 0.0
        %v568 = vand.u32 %v175, 4294901760
        %569 = vmatpush1.msra.mxu0 %v568
        %570 = vmatprep.subr.mxu0 0.0
        %571 = vmatpush1.msra.mxu0 0.0
        %572 = vmatprep.subr.mxu0 0.0
        %573 = vmatpush1.msra.mxu0 0.0
        %574 = vmatprep.subr.mxu0 0.0
        %575 = vmatpush1.msra.mxu0 0.0
        %576 = vmatprep.subr.mxu0 0.0
        %577 = vmatpush1.msra.mxu0 0.0
        %578 = vmatprep.subr.mxu0 0.0
        %579 = vmatpush1.msra.mxu0 0.0
        %580 = vmatprep.subr.mxu0 0.0
        %581 = vmatpush1.msra.mxu0 0.0
        %582 = vmatprep.subr.mxu0 0.0
        %583 = vmatpush1.msra.mxu0 0.0
        %584 = vmatprep.subr.mxu0 0.0
        %585 = vmatpush1.msra.mxu0 0.0
        %586 = vmatprep.subr.mxu0 0.0
        %587 = vmatpush1.msra.mxu0 0.0
        %588 = vmatprep.subr.mxu0 0.0
        %589 = vmatpush1.msra.mxu0 0.0
        %590 = vmatprep.subr.mxu0 0.0
        %591 = vmatpush1.msra.mxu0 0.0
        %592 = vmatprep.subr.mxu0 0.0
        %593 = vmatpush1.msra.mxu0 0.0
        %594 = vmatprep.subr.mxu0 0.0
        %595 = vmatpush1.msra.mxu0 0.0
        %596 = vmatprep.subr.mxu0 0.0
        %597 = vmatpush1.msra.mxu0 0.0
        %598 = vmatprep.subr.mxu0 0.0
        %599 = vmatpush1.msra.mxu0 0.0
        %600 = vmatprep.subr.mxu0 0.0
        %601 = vmatpush1.msra.mxu0 0.0
        %602 = vmatprep.mubr.f32.mxu0 0.0
        %v603 = vand.u32 %v159, 4294901760
        %v604 = vsub.f32 %v159, %v603
        %v605 = vand.u32 %v604, 4294901760
        %606 = vmatmul.mubr.f32.gmra.mrb[0].mxu0 %v605
        %v607 = vpop.f32.mrb[0].mxu0
        %v608 = vadd.f32 %v519, %v607
        %v609 = vpop.f32.mrb[0].mxu0
        %610 = vdwg.mxu0
        %611 = vmatprep.subr.mxu0 0.0
        %v612 = vand.u32 %v160, 4294901760
        %v613 = vsub.f32 %v160, %v612
        %v614 = vand.u32 %v613, 4294901760
        %615 = vmatpush1.msra.mxu0 %v614
        %616 = vmatprep.subr.mxu0 0.0
        %v617 = vand.u32 %v161, 4294901760
        %v618 = vsub.f32 %v161, %v617
        %v619 = vand.u32 %v618, 4294901760
        %620 = vmatpush1.msra.mxu0 %v619
        %621 = vmatprep.subr.mxu0 0.0
        %v622 = vand.u32 %v162, 4294901760
        %v623 = vsub.f32 %v162, %v622
        %v624 = vand.u32 %v623, 4294901760
        %625 = vmatpush1.msra.mxu0 %v624
        %626 = vmatprep.subr.mxu0 0.0
        %v627 = vand.u32 %v163, 4294901760
        %v628 = vsub.f32 %v163, %v627
        %v629 = vand.u32 %v628, 4294901760
        %630 = vmatpush1.msra.mxu0 %v629
        %631 = vmatprep.subr.mxu0 0.0
        %v632 = vand.u32 %v164, 4294901760
        %v633 = vsub.f32 %v164, %v632
        %v634 = vand.u32 %v633, 4294901760
        %635 = vmatpush1.msra.mxu0 %v634
        %636 = vmatprep.subr.mxu0 0.0
        %v637 = vand.u32 %v165, 4294901760
        %v638 = vsub.f32 %v165, %v637
        %v639 = vand.u32 %v638, 4294901760
        %640 = vmatpush1.msra.mxu0 %v639
        %641 = vmatprep.subr.mxu0 0.0
        %v642 = vand.u32 %v166, 4294901760
        %v643 = vsub.f32 %v166, %v642
        %v644 = vand.u32 %v643, 4294901760
        %645 = vmatpush1.msra.mxu0 %v644
        %646 = vmatprep.subr.mxu0 0.0
        %v647 = vand.u32 %v167, 4294901760
        %v648 = vsub.f32 %v167, %v647
        %v649 = vand.u32 %v648, 4294901760
        %650 = vmatpush1.msra.mxu0 %v649
        %651 = vmatprep.subr.mxu0 0.0
        %v652 = vand.u32 %v168, 4294901760
        %v653 = vsub.f32 %v168, %v652
        %v654 = vand.u32 %v653, 4294901760
        %655 = vmatpush1.msra.mxu0 %v654
        %656 = vmatprep.subr.mxu0 0.0
        %v657 = vand.u32 %v169, 4294901760
        %v658 = vsub.f32 %v169, %v657
        %v659 = vand.u32 %v658, 4294901760
        %660 = vmatpush1.msra.mxu0 %v659
        %661 = vmatprep.subr.mxu0 0.0
        %v662 = vand.u32 %v170, 4294901760
        %v663 = vsub.f32 %v170, %v662
        %v664 = vand.u32 %v663, 4294901760
        %665 = vmatpush1.msra.mxu0 %v664
        %666 = vmatprep.subr.mxu0 0.0
        %v667 = vand.u32 %v171, 4294901760
        %v668 = vsub.f32 %v171, %v667
        %v669 = vand.u32 %v668, 4294901760
        %670 = vmatpush1.msra.mxu0 %v669
        %671 = vmatprep.subr.mxu0 0.0
        %v672 = vand.u32 %v172, 4294901760
        %v673 = vsub.f32 %v172, %v672
        %v674 = vand.u32 %v673, 4294901760
        %675 = vmatpush1.msra.mxu0 %v674
        %676 = vmatprep.subr.mxu0 0.0
        %v677 = vand.u32 %v173, 4294901760
        %v678 = vsub.f32 %v173, %v677
        %v679 = vand.u32 %v678, 4294901760
        %680 = vmatpush1.msra.mxu0 %v679
        %681 = vmatprep.subr.mxu0 0.0
        %v682 = vand.u32 %v174, 4294901760
        %v683 = vsub.f32 %v174, %v682
        %v684 = vand.u32 %v683, 4294901760
        %685 = vmatpush1.msra.mxu0 %v684
        %686 = vmatprep.subr.mxu0 0.0
        %v687 = vand.u32 %v175, 4294901760
        %v688 = vsub.f32 %v175, %v687
        %v689 = vand.u32 %v688, 4294901760
        %690 = vmatpush1.msra.mxu0 %v689
        %691 = vmatprep.subr.mxu0 0.0
        %692 = vmatpush1.msra.mxu0 0.0
        %693 = vmatprep.subr.mxu0 0.0
        %694 = vmatpush1.msra.mxu0 0.0
        %695 = vmatprep.subr.mxu0 0.0
        %696 = vmatpush1.msra.mxu0 0.0
        %697 = vmatprep.subr.mxu0 0.0
        %698 = vmatpush1.msra.mxu0 0.0
        %699 = vmatprep.subr.mxu0 0.0
        %700 = vmatpush1.msra.mxu0 0.0
        %701 = vmatprep.subr.mxu0 0.0
        %702 = vmatpush1.msra.mxu0 0.0
        %703 = vmatprep.subr.mxu0 0.0
        %704 = vmatpush1.msra.mxu0 0.0
        %705 = vmatprep.subr.mxu0 0.0
        %706 = vmatpush1.msra.mxu0 0.0
        %707 = vmatprep.subr.mxu0 0.0
        %708 = vmatpush1.msra.mxu0 0.0
        %709 = vmatprep.subr.mxu0 0.0
        %710 = vmatpush1.msra.mxu0 0.0
        %711 = vmatprep.subr.mxu0 0.0
        %712 = vmatpush1.msra.mxu0 0.0
        %713 = vmatprep.subr.mxu0 0.0
        %714 = vmatpush1.msra.mxu0 0.0
        %715 = vmatprep.subr.mxu0 0.0
        %716 = vmatpush1.msra.mxu0 0.0
        %717 = vmatprep.subr.mxu0 0.0
        %718 = vmatpush1.msra.mxu0 0.0
        %719 = vmatprep.subr.mxu0 0.0
        %720 = vmatpush1.msra.mxu0 0.0
        %721 = vmatprep.subr.mxu0 0.0
        %722 = vmatpush1.msra.mxu0 0.0
        %723 = vmatprep.mubr.f32.mxu0 0.0
        %v724 = vand.u32 %v159, 4294901760
        %725 = vmatmul.mubr.f32.gmra.mrb[0].mxu0 %v724
        %v726 = vpop.f32.mrb[0].mxu0
        %v727 = vadd.f32 %v608, %v726
        %v728 = vpop.f32.mrb[0].mxu0
        %729 = vdwg.mxu0
        %730 = vmatprep.subr.mxu0 0.0
        %v731 = vand.u32 %v160, 4294901760
        %732 = vmatpush1.msra.mxu0 %v731
        %733 = vmatprep.subr.mxu0 0.0
        %v734 = vand.u32 %v161, 4294901760
        %735 = vmatpush1.msra.mxu0 %v734
        %736 = vmatprep.subr.mxu0 0.0
        %v737 = vand.u32 %v162, 4294901760
        %738 = vmatpush1.msra.mxu0 %v737
        %739 = vmatprep.subr.mxu0 0.0
        %v740 = vand.u32 %v163, 4294901760
        %741 = vmatpush1.msra.mxu0 %v740
        %742 = vmatprep.subr.mxu0 0.0
        %v743 = vand.u32 %v164, 4294901760
        %744 = vmatpush1.msra.mxu0 %v743
        %745 = vmatprep.subr.mxu0 0.0
        %v746 = vand.u32 %v165, 4294901760
        %747 = vmatpush1.msra.mxu0 %v746
        %748 = vmatprep.subr.mxu0 0.0
        %v749 = vand.u32 %v166, 4294901760
        %750 = vmatpush1.msra.mxu0 %v749
        %751 = vmatprep.subr.mxu0 0.0
        %v752 = vand.u32 %v167, 4294901760
        %753 = vmatpush1.msra.mxu0 %v752
        %754 = vmatprep.subr.mxu0 0.0
        %v755 = vand.u32 %v168, 4294901760
        %756 = vmatpush1.msra.mxu0 %v755
        %757 = vmatprep.subr.mxu0 0.0
        %v758 = vand.u32 %v169, 4294901760
        %759 = vmatpush1.msra.mxu0 %v758
        %760 = vmatprep.subr.mxu0 0.0
        %v761 = vand.u32 %v170, 4294901760
        %762 = vmatpush1.msra.mxu0 %v761
        %763 = vmatprep.subr.mxu0 0.0
        %v764 = vand.u32 %v171, 4294901760
        %765 = vmatpush1.msra.mxu0 %v764
        %766 = vmatprep.subr.mxu0 0.0
        %v767 = vand.u32 %v172, 4294901760
        %768 = vmatpush1.msra.mxu0 %v767
        %769 = vmatprep.subr.mxu0 0.0
        %v770 = vand.u32 %v173, 4294901760
        %771 = vmatpush1.msra.mxu0 %v770
        %772 = vmatprep.subr.mxu0 0.0
        %v773 = vand.u32 %v174, 4294901760
        %774 = vmatpush1.msra.mxu0 %v773
        %775 = vmatprep.subr.mxu0 0.0
        %v776 = vand.u32 %v175, 4294901760
        %777 = vmatpush1.msra.mxu0 %v776
        %778 = vmatprep.subr.mxu0 0.0
        %779 = vmatpush1.msra.mxu0 0.0
        %780 = vmatprep.subr.mxu0 0.0
        %781 = vmatpush1.msra.mxu0 0.0
        %782 = vmatprep.subr.mxu0 0.0
        %783 = vmatpush1.msra.mxu0 0.0
        %784 = vmatprep.subr.mxu0 0.0
        %785 = vmatpush1.msra.mxu0 0.0
        %786 = vmatprep.subr.mxu0 0.0
        %787 = vmatpush1.msra.mxu0 0.0
        %788 = vmatprep.subr.mxu0 0.0
        %789 = vmatpush1.msra.mxu0 0.0
        %790 = vmatprep.subr.mxu0 0.0
        %791 = vmatpush1.msra.mxu0 0.0
        %792 = vmatprep.subr.mxu0 0.0
        %793 = vmatpush1.msra.mxu0 0.0
        %794 = vmatprep.subr.mxu0 0.0
        %795 = vmatpush1.msra.mxu0 0.0
        %796 = vmatprep.subr.mxu0 0.0
        %797 = vmatpush1.msra.mxu0 0.0
        %798 = vmatprep.subr.mxu0 0.0
        %799 = vmatpush1.msra.mxu0 0.0
        %800 = vmatprep.subr.mxu0 0.0
        %801 = vmatpush1.msra.mxu0 0.0
        %802 = vmatprep.subr.mxu0 0.0
        %803 = vmatpush1.msra.mxu0 0.0
        %804 = vmatprep.subr.mxu0 0.0
        %805 = vmatpush1.msra.mxu0 0.0
        %806 = vmatprep.subr.mxu0 0.0
        %807 = vmatpush1.msra.mxu0 0.0
        %808 = vmatprep.subr.mxu0 0.0
        %809 = vmatpush1.msra.mxu0 0.0
        %810 = vmatprep.mubr.f32.mxu0 0.0
        %v811 = vand.u32 %v159, 4294901760
        %812 = vmatmul.mubr.f32.gmra.mrb[0].mxu0 %v811
        %v813 = vpop.f32.mrb[0].mxu0
        %v814 = vadd.f32 %v727, %v813
        %v815 = vpop.f32.mrb[0].mxu0
        %816 = vdwg.mxu0
        %vm817 = vcmask 785408
        %818 = vst.msk [vmem:[%s134] sm:$0xff] %vm817, %v814
        %s819 = sand.u32 %s71, 1
        %s820 = scalar_lea.sflag [#allocation3], %s819
        %s821 = sand.u32 %s71, 1
        %s822 = smul.addr %s821, 8
        %s823 = scalar_lea.vmem [#allocation2], %s822
        // Predicated region
        $region29: #{tpu_custom_call.1} parent=27 // pred_check
          %p824 = pneg %p81
        $region30: #{tpu_custom_call.1} parent=27 // pred_check_branch
          %826 = sbr.rel (%p824) target = $region32
        $region31: #{tpu_custom_call.1} parent=27 // pred_region
          %s828 = ssub.s32 128, 128
          %829 = vsyncadd %s820, %s828
          %s830 = smul.addr %s16, 128
          %s831 = scalar_lea.hbm %s2, %s830
          %s833 = sshll.u32 %s823, 4
          %s834 = int_to_ptr.vmem [resolvable:$true] %s833
          %836 = dma.vmem_to_hbm [thread:$0]  %s834, 128, %s831, %s820
        $region32: #{tpu_custom_call.1} parent=27 // pred_fallthru
          _
      $region28: #{tpu_custom_call.1} parent=5 // pred_fallthru
        _
      %p837 = scmp.le.s32.totalorder 2, %s11
      // Predicated region
      $region33: #{tpu_custom_call.1} parent=5 // pred_check
        %p838 = pneg %p837
      $region34: #{tpu_custom_call.1} parent=5 // pred_check_branch
        %840 = sbr.rel (%p838) target = $region36
      $region35: #{tpu_custom_call.1} parent=5 // pred_region
        %s841 = ssub.s32 %s11, 2
        // Predicated region
        $region37: #{tpu_custom_call.1} parent=35 // pred_check
          %p842 = pneg %p87
        $region38: #{tpu_custom_call.1} parent=35 // pred_check_branch
          %844 = sbr.rel (%p842) target = $region40
        $region39: #{tpu_custom_call.1} parent=35 // pred_region
          %s845 = sand.u32 %s72, 1
          %s846 = scalar_lea.sflag [#allocation3], %s845
          %s847 = sand.u32 %s72, 1
          %s848 = smul.addr %s847, 8
          %s849 = scalar_lea.vmem [#allocation2], %s848
          %850 = dma.done %s846, 128
        $region40: #{tpu_custom_call.1} parent=35 // pred_fallthru
          _
      $region36: #{tpu_custom_call.1} parent=5 // pred_fallthru
        _
    $region6: #{tpu_custom_call.1} parent=1 // loop_footer
      %s15 = sadd.s32 1, %s11
    $region7: #{tpu_custom_call.1} parent=1 // loop_footer_branch
      %10 = sbr.rel target = $region3
    $region8: #{tpu_custom_call.1} parent=1 // loop_exit
      _
    %851 = vsyncpa [#allocation3], 1
    %s852 = scalar_lea.sflag [#allocation3], 1
    %853 = vsyncpa %s852, 1

</llo_original>
